<compile_context>
chip_gen: v7x
topology: tpu7x:2x2x1
jax: 0.10.0
libtpu: 0.0.40
codegen_flags: <defaults>
</compile_context>

<pallas_src>
import functools

import jax
import jax.numpy as jnp
from jax.experimental import pallas as pl
from jax.experimental.pallas import tpu as pltpu


# ---------------------------------------------------------------------------
# Pallas kernel: GroupNorm + adaptive affine on a flattened (rows, Cg*HW) slab
#   x block  : (rt, Cg*HW)   one row == one (batch, group) unit
#   gb block : (rt, 2*Cg)    [:, :Cg] = 1 + scale, [:, Cg:] = bias (per channel)
#   out      : ((x - mean) * rsqrt(var + eps)) * gain + bias
# ---------------------------------------------------------------------------
def _group_norm_mod_kernel(x_ref, gb_ref, o_ref, *, eps, cg, hw):
    f32 = jnp.float32

    # ---- stats pass (single sweep; f32 tile dead after the reductions) ----
    x = x_ref[...].astype(f32)                       # (rt, Cg*HW)
    n = x.shape[-1]
    inv_n = 1.0 / float(n)

    # Shifted moments: subtracting the per-row first element keeps
    # E[x^2] - E[x]^2 numerically stable when |mean| >> std.
    shift = x[:, 0:1]                                # (rt, 1)
    xs = x - shift
    s1 = jnp.sum(xs, axis=-1, keepdims=True)         # (rt, 1)
    s2 = jnp.sum(xs * xs, axis=-1, keepdims=True)    # (rt, 1)
    m_s = s1 * inv_n
    var = jnp.maximum(s2 * inv_n - m_s * m_s, 0.0)
    mean = m_s + shift
    inv = jax.lax.rsqrt(var + eps)                   # per-row, EUP slot

    # ---- affine pass: fold normalizer into per-channel gain/bias ----------
    gb = gb_ref[...].astype(f32)                     # (rt, 2*Cg)
    # Static unroll over the (small) channels-per-group count. Each channel is
    # a contiguous lane window, so loads/stores stay dense and no broadcast of
    # gain/bias to full tile width is ever materialized. Re-reading x_ref here
    # (instead of reusing the f32 stats tile) keeps vreg/VMEM pressure low.
    for ci in range(cg):
        a_c = inv * gb[:, ci:ci + 1]                          # (rt, 1)
        b_c = gb[:, cg + ci:cg + ci + 1] - mean * a_c         # (rt, 1)
        sl = slice(ci * hw, (ci + 1) * hw)
        o_ref[:, sl] = (x_ref[:, sl].astype(f32) * a_c + b_c).astype(o_ref.dtype)


# ---------------------------------------------------------------------------
# Tile sizing
# ---------------------------------------------------------------------------
def _round_up(v, m):
    return ((v + m - 1) // m) * m


def _pick_row_tile(num_rows, row_bytes, row_mult,
                   *, target_block_bytes=2 << 20, min_steps=16):
    """Row tile: multiple of `row_mult`, block <= ~2 MiB (the HBM-bound sweet
    spot), and at least `min_steps` grid steps when the row count allows, so
    each v7x TensorCore keeps multiple pipelined steps (DMAs stay hidden)."""
    if num_rows <= row_mult:
        return num_rows
    rt = (target_block_bytes // max(row_bytes, 1)) // row_mult * row_mult
    rt = max(rt, row_mult)
    rt_cap = (num_rows // min_steps) // row_mult * row_mult
    if rt_cap >= row_mult:
        rt = min(rt, rt_cap)
    else:
        rt = min(rt, row_mult)      # as many steps as the row count allows
    return rt


# ---------------------------------------------------------------------------
# Wrapper
# ---------------------------------------------------------------------------
def adaptive_group_norm(x, c, fc_w, fc_b, *, num_groups=32, eps=1e-5):
    """x: (N, C, H, W); c: (N, c_dim); fc_w: (c_dim, 2*C); fc_b: (2*C,)."""
    N, C, H, W = x.shape
    G = num_groups
    assert C % G == 0, "n_channels must be divisible by num_groups"
    Cg = C // G
    HW = H * W
    NG = N * G
    L = Cg * HW

    # --- fc branch: SiLU -> Linear in plain JAX (tiny; XLA fuses it). -------
    h = c.astype(jnp.float32)
    h = h * jax.nn.sigmoid(h)
    fc = h @ fc_w.astype(jnp.float32) + fc_b.astype(jnp.float32)     # (N, 2C)
    gain = (1.0 + fc[:, :C]).reshape(NG, Cg)                         # per (n, c)
    bias = fc[:, C:].reshape(NG, Cg)
    gb = jnp.concatenate([gain, bias], axis=-1).astype(jnp.float32)  # (NG, 2*Cg)

    # --- normalization + modulation hot path ---------------------------------
    x2 = x.reshape(NG, L)                            # contiguous reshape (free)

    itemsize = jnp.dtype(x.dtype).itemsize
    row_mult = max(8, 32 // itemsize)                # 8 for f32, 16 for bf16
    row_bytes = _round_up(L, 128) * itemsize
    rt = _pick_row_tile(NG, row_bytes, row_mult)
    grid = (pl.cdiv(NG, rt),)

    block_bytes = rt * row_bytes
    # 2x in + 2x out buffers plus in-kernel f32 temps; modest, per-core safe.
    vmem_limit = int(min(max(8 * block_bytes + (4 << 20), 24 << 20), 56 << 20))

    out = pl.pallas_call(
        functools.partial(_group_norm_mod_kernel, eps=eps, cg=Cg, hw=HW),
        out_shape=jax.ShapeDtypeStruct((NG, L), x.dtype),
        grid=grid,
        in_specs=[
            pl.BlockSpec((rt, L), lambda i: (i, 0)),
            pl.BlockSpec((rt, 2 * Cg), lambda i: (i, 0)),
        ],
        out_specs=pl.BlockSpec((rt, L), lambda i: (i, 0)),
        compiler_params=pltpu.CompilerParams(
            dimension_semantics=("parallel",),
            vmem_limit_bytes=vmem_limit,
        ),
    )(x2, gb)

    return out.reshape(N, C, H, W)


# ---------------------------------------------------------------------------
# Plain-JAX reference mirroring the PyTorch forward (F.group_norm + modulation)
# ---------------------------------------------------------------------------
def _reference(x, c, fc_w, fc_b, num_groups, eps=1e-5):
    N, C, H, W = x.shape
    xg = x.reshape(N, num_groups, -1)
    mean = jnp.mean(xg, axis=-1, keepdims=True)
    var = jnp.var(xg, axis=-1, keepdims=True)            # population variance
    xn = ((xg - mean) / jnp.sqrt(var + eps)).reshape(N, C, H, W)
    h = c * jax.nn.sigmoid(c)
    fc = h @ fc_w + fc_b
    scale = fc[:, :C][:, :, None, None]
    bias = fc[:, C:][:, :, None, None]
    return xn * (1.0 + scale) + bias


if __name__ == "__main__":
    N, C, H, W = 2, 64, 16, 16
    num_groups = 32          # module default (requires C % 32 == 0)
    c_dim = 32

    key = jax.random.PRNGKey(0)
    kx, kc, kw, kb = jax.random.split(key, 4)
    x = jax.random.normal(kx, (N, C, H, W), dtype=jnp.float32)
    cond = jax.random.normal(kc, (N, c_dim), dtype=jnp.float32)
    # nn.Linear(c_dim, 2*C) parameters; weight stored transposed as (c_dim, 2C).
    fc_w = jax.random.normal(kw, (c_dim, 2 * C), dtype=jnp.float32) * (1.0 / c_dim ** 0.5)
    fc_b = jax.random.normal(kb, (2 * C,), dtype=jnp.float32) * 0.1

    fn = jax.jit(functools.partial(adaptive_group_norm, num_groups=num_groups))
    out = jax.block_until_ready(fn(x, cond, fc_w, fc_b))

    ref = _reference(x, cond, fc_w, fc_b, num_groups)
    assert out.shape == (N, C, H, W)
    assert jnp.allclose(out, ref, rtol=1e-4, atol=1e-4), \
        float(jnp.max(jnp.abs(out - ref)))

    print("KERNEL_OK")
</pallas_src>

<mosaic_0001>
module attributes {stable_mosaic.version = 11 : i64} {
  func.func @_group_norm_mod_kernel(%arg0: i32, %arg1: memref<8x512xf32, #tpu.memory_space<vmem>>, %arg2: memref<8x4xf32, #tpu.memory_space<vmem>>, %arg3: memref<8x512xf32, #tpu.memory_space<vmem>>) attributes {dimension_semantics = [#tpu.dimension_semantics<parallel>], iteration_bounds = array<i64: 8>, scalar_prefetch = 0 : i64, scratch_operands = 0 : i64, tpu.core_type = #tpu.core_type<tc>, window_params = [{transform_indices = @transform_0, window_bounds = array<i64: 8, 512>}, {transform_indices = @transform_1, window_bounds = array<i64: 8, 4>}, {transform_indices = @transform_2, window_bounds = array<i64: 8, 512>}]} {
    %c0 = arith.constant 0 : index
    %c0_0 = arith.constant 0 : index
    %0 = vector.load %arg1[%c0, %c0_0] : memref<8x512xf32, #tpu.memory_space<vmem>>, vector<8x512xf32>
    %1 = vector.extract_strided_slice %0 {offsets = [0, 0], sizes = [8, 1], strides = [1, 1]} : vector<8x512xf32> to vector<8x1xf32>
    %2 = vector.broadcast %1 : vector<8x1xf32> to vector<8x512xf32>
    %3 = arith.subf %0, %2 : vector<8x512xf32>
    %cst = arith.constant dense<0.000000e+00> : vector<8xf32>
    %4 = vector.multi_reduction <add>, %3, %cst [1] : vector<8x512xf32> to vector<8xf32>
    %5 = vector.shape_cast %4 : vector<8xf32> to vector<8x1xf32>
    %6 = arith.mulf %3, %3 : vector<8x512xf32>
    %cst_1 = arith.constant dense<0.000000e+00> : vector<8xf32>
    %7 = vector.multi_reduction <add>, %6, %cst_1 [1] : vector<8x512xf32> to vector<8xf32>
    %8 = vector.shape_cast %7 : vector<8xf32> to vector<8x1xf32>
    %cst_2 = arith.constant 0.001953125 : f32
    %9 = vector.broadcast %cst_2 : f32 to vector<8x1xf32>
    %10 = arith.mulf %5, %9 : vector<8x1xf32>
    %cst_3 = arith.constant 0.001953125 : f32
    %11 = vector.broadcast %cst_3 : f32 to vector<8x1xf32>
    %12 = arith.mulf %8, %11 : vector<8x1xf32>
    %13 = arith.mulf %10, %10 : vector<8x1xf32>
    %14 = arith.subf %12, %13 : vector<8x1xf32>
    %cst_4 = arith.constant 0.000000e+00 : f32
    %15 = vector.broadcast %cst_4 : f32 to vector<8x1xf32>
    %16 = arith.maximumf %14, %15 : vector<8x1xf32>
    %17 = arith.addf %10, %1 : vector<8x1xf32>
    %cst_5 = arith.constant 9.99999974E-6 : f32
    %18 = vector.broadcast %cst_5 : f32 to vector<8x1xf32>
    %19 = arith.addf %16, %18 : vector<8x1xf32>
    %20 = math.rsqrt %19 : vector<8x1xf32>
    %c0_6 = arith.constant 0 : index
    %c0_7 = arith.constant 0 : index
    %21 = vector.load %arg2[%c0_6, %c0_7] : memref<8x4xf32, #tpu.memory_space<vmem>>, vector<8x4xf32>
    %22 = vector.extract_strided_slice %21 {offsets = [0, 0], sizes = [8, 1], strides = [1, 1]} : vector<8x4xf32> to vector<8x1xf32>
    %23 = arith.mulf %20, %22 : vector<8x1xf32>
    %24 = vector.extract_strided_slice %21 {offsets = [0, 2], sizes = [8, 1], strides = [1, 1]} : vector<8x4xf32> to vector<8x1xf32>
    %25 = arith.mulf %17, %23 : vector<8x1xf32>
    %26 = arith.subf %24, %25 : vector<8x1xf32>
    %c0_8 = arith.constant 0 : index
    %c0_9 = arith.constant 0 : index
    %27 = vector.load %arg1[%c0_8, %c0_9] : memref<8x512xf32, #tpu.memory_space<vmem>>, vector<8x256xf32>
    %28 = vector.broadcast %23 : vector<8x1xf32> to vector<8x256xf32>
    %29 = arith.mulf %27, %28 : vector<8x256xf32>
    %30 = vector.broadcast %26 : vector<8x1xf32> to vector<8x256xf32>
    %31 = arith.addf %29, %30 : vector<8x256xf32>
    %c0_10 = arith.constant 0 : index
    %c0_11 = arith.constant 0 : index
    %32 = vector.load %arg3[%c0_10, %c0_11] : memref<8x512xf32, #tpu.memory_space<vmem>>, vector<8x256xf32>
    tpu.vector_store %arg3[%c0_10, %c0_11], %31 {strides = array<i32>} : memref<8x512xf32, #tpu.memory_space<vmem>>, vector<8x256xf32>,
    %33 = vector.extract_strided_slice %21 {offsets = [0, 1], sizes = [8, 1], strides = [1, 1]} : vector<8x4xf32> to vector<8x1xf32>
    %34 = arith.mulf %20, %33 : vector<8x1xf32>
    %35 = vector.extract_strided_slice %21 {offsets = [0, 3], sizes = [8, 1], strides = [1, 1]} : vector<8x4xf32> to vector<8x1xf32>
    %36 = arith.mulf %17, %34 : vector<8x1xf32>
    %37 = arith.subf %35, %36 : vector<8x1xf32>
    %c0_12 = arith.constant 0 : index
    %c256 = arith.constant 256 : index
    %38 = vector.load %arg1[%c0_12, %c256] : memref<8x512xf32, #tpu.memory_space<vmem>>, vector<8x256xf32>
    %39 = vector.broadcast %34 : vector<8x1xf32> to vector<8x256xf32>
    %40 = arith.mulf %38, %39 : vector<8x256xf32>
    %41 = vector.broadcast %37 : vector<8x1xf32> to vector<8x256xf32>
    %42 = arith.addf %40, %41 : vector<8x256xf32>
    %c0_13 = arith.constant 0 : index
    %c256_14 = arith.constant 256 : index
    %43 = vector.load %arg3[%c0_13, %c256_14] : memref<8x512xf32, #tpu.memory_space<vmem>>, vector<8x256xf32>
    tpu.vector_store %arg3[%c0_13, %c256_14], %42 {strides = array<i32>} : memref<8x512xf32, #tpu.memory_space<vmem>>, vector<8x256xf32>,
    return
  }
  func.func @transform_0(%arg0: i32) -> (i32, i32) {
    %c0_i32 = arith.constant 0 : i32
    %c0_i32_0 = arith.constant 0 : i32
    return %arg0, %c0_i32 : i32, i32
  }
  func.func @transform_1(%arg0: i32) -> (i32, i32) {
    %c0_i32 = arith.constant 0 : i32
    %c0_i32_0 = arith.constant 0 : i32
    return %arg0, %c0_i32 : i32, i32
  }
  func.func @transform_2(%arg0: i32) -> (i32, i32) {
    %c0_i32 = arith.constant 0 : i32
    %c0_i32_0 = arith.constant 0 : i32
    return %arg0, %c0_i32 : i32, i32
  }
}

</mosaic_0001>

<llo_original>
// kernel: adaptive_group_norm.1
$region0: #{adaptive_group_norm.1}
  #allocation0 [shape = 'u32[]', space=smem, size = 0x4, offset = 0x4, fixed_abs, tag = 'smem constant byte address 0x4 - core index']
  #allocation1 [shape = 'u32[144,128]{1,0:T(1,128)}', space=vmem, size = 0x12000, scoped, tag = 'internal scratch']
  %s0 = inlined_call_operand.vmem [shape: f32[64,512], index: 0, kind: input, shape index: {}]
  %s1 = inlined_call_operand.vmem [shape: f32[64,4], index: 1, kind: input, shape index: {}]
  %s2 = inlined_call_operand.vmem [shape: f32[64,512], index: 2, kind: output, shape index: {}]
  %s3 = sld [smem:[#allocation0]]
  $region41: #{adaptive_group_norm.1} parent=0
    _
  %s5 = ssub.s32 1, %s3
  %s6 = scalar_select 0, %s5, %s3
  loop: start=0, step=1, limit=10
  $region2: #{adaptive_group_norm.1} parent=0 // loop_pre_header
    _
  $region3: #{adaptive_group_norm.1} parent=0 // loop_header
    %s8 = sphi 0, %s12
    %p9 = scmp.ge.s32.totalorder %s8, 10
    %s18 = sphi 0, %s20
    %s21 = sphi 0, %s18
    %s22 = sphi 0, %s21
    %s38 = sphi 0, %s22
    %s44 = sphi 0, %s46
    %s47 = sphi 0, %s44
    %s48 = sphi 0, %s47
    %s64 = sphi 0, %s48
    %s70 = sphi 0, %s72
    %s73 = sphi 0, %s70
    %s74 = sphi 0, %s73
    %s90 = sphi 0, %s74
  $region4: #{adaptive_group_norm.1} parent=0 // loop_header_branch
    %11 = sbr.rel (%p9) target = $region8
  $region5: #{adaptive_group_norm.1} parent=0 // loop_body
    %s13 = ssub.s32 %s8, 1
    %s14 = ssub.s32 %s8, 2
    %s15 = sadd.s32 %s8, 1
    %s16 = ssub.s32 %s8, %s15
    %p17 = scmp.eq.s32.totalorder %s16, 0
    %s19 = sadd.s32 %s18, 1
    %s20 = scalar_select %p17, %s18, %s19
    %p23 = pneg %p17
    %p24 = scmp.eq.s32.totalorder %s8, 7
    %p25 = por %p23, %p24
    %p26 = scmp.ne.s32.totalorder %s18, %s21
    %p27 = scmp.eq.s32.totalorder %s8, 0
    %p28 = por %p26, %p27
    %p29 = scmp.ne.s32.totalorder %s18, %s21
    %p30 = scmp.eq.s32.totalorder %s13, 7
    %p31 = por %p29, %p30
    %p32 = scmp.ne.s32.totalorder %s21, %s22
    %p33 = scmp.eq.s32.totalorder %s13, 0
    %p34 = por %p32, %p33
    %p35 = scmp.ne.s32.totalorder %s21, %s22
    %p36 = scmp.eq.s32.totalorder %s14, 7
    %p37 = por %p35, %p36
    %p39 = scmp.ne.s32.totalorder %s22, %s38
    %p40 = scmp.eq.s32.totalorder %s14, 0
    %p41 = por %p39, %p40
    %s42 = ssub.s32 %s8, %s15
    %p43 = scmp.eq.s32.totalorder %s42, 0
    %s45 = sadd.s32 %s44, 1
    %s46 = scalar_select %p43, %s44, %s45
    %p49 = pneg %p43
    %p50 = scmp.eq.s32.totalorder %s8, 7
    %p51 = por %p49, %p50
    %p52 = scmp.ne.s32.totalorder %s44, %s47
    %p53 = scmp.eq.s32.totalorder %s8, 0
    %p54 = por %p52, %p53
    %p55 = scmp.ne.s32.totalorder %s44, %s47
    %p56 = scmp.eq.s32.totalorder %s13, 7
    %p57 = por %p55, %p56
    %p58 = scmp.ne.s32.totalorder %s47, %s48
    %p59 = scmp.eq.s32.totalorder %s13, 0
    %p60 = por %p58, %p59
    %p61 = scmp.ne.s32.totalorder %s47, %s48
    %p62 = scmp.eq.s32.totalorder %s14, 7
    %p63 = por %p61, %p62
    %p65 = scmp.ne.s32.totalorder %s48, %s64
    %p66 = scmp.eq.s32.totalorder %s14, 0
    %p67 = por %p65, %p66
    %s68 = ssub.s32 %s8, %s15
    %p69 = scmp.eq.s32.totalorder %s68, 0
    %s71 = sadd.s32 %s70, 1
    %s72 = scalar_select %p69, %s70, %s71
    %p75 = pneg %p69
    %p76 = scmp.eq.s32.totalorder %s8, 7
    %p77 = por %p75, %p76
    %p78 = scmp.ne.s32.totalorder %s70, %s73
    %p79 = scmp.eq.s32.totalorder %s8, 0
    %p80 = por %p78, %p79
    %p81 = scmp.ne.s32.totalorder %s70, %s73
    %p82 = scmp.eq.s32.totalorder %s13, 7
    %p83 = por %p81, %p82
    %p84 = scmp.ne.s32.totalorder %s73, %s74
    %p85 = scmp.eq.s32.totalorder %s13, 0
    %p86 = por %p84, %p85
    %p87 = scmp.ne.s32.totalorder %s73, %s74
    %p88 = scmp.eq.s32.totalorder %s14, 7
    %p89 = por %p87, %p88
    %p91 = scmp.ne.s32.totalorder %s74, %s90
    %p92 = scmp.eq.s32.totalorder %s14, 0
    %p93 = por %p91, %p92
    %p94 = scmp.le.s32.totalorder 1, %s8
    %p95 = scmp.lt.s32.totalorder %s8, 9
    %p96 = pnand %p94, %p95
    %p97 = pneg %p96
    // Predicated region
    $region9: #{adaptive_group_norm.1} parent=5 // pred_check
      _
    $region10: #{adaptive_group_norm.1} parent=5 // pred_check_branch
      %99 = sbr.rel (%p96) target = $region12
    $region11: #{adaptive_group_norm.1} parent=5 // pred_region
      %s100 = ssub.s32 %s8, 1
    $region12: #{adaptive_group_norm.1} parent=5 // pred_fallthru
      _
    %p101 = scmp.lt.s32.totalorder %s8, 8
    // Predicated region
    $region13: #{adaptive_group_norm.1} parent=5 // pred_check
      %p102 = pneg %p101
    $region14: #{adaptive_group_norm.1} parent=5 // pred_check_branch
      %104 = sbr.rel (%p102) target = $region16
    $region15: #{adaptive_group_norm.1} parent=5 // pred_region
      // Predicated region
      $region17: #{adaptive_group_norm.1} parent=15 // pred_check
        %p105 = pneg %p28
      $region18: #{adaptive_group_norm.1} parent=15 // pred_check_branch
        %107 = sbr.rel (%p105) target = $region20
      $region19: #{adaptive_group_norm.1} parent=15 // pred_region
        %p108 = scmp.lt.s32.totalorder %s8, 7
        %s109 = scalar_select %p108, %s8, 7
        %s110 = smul.addr %s109, 4
        %s111 = smul.addr %s110, 8
        %s112 = scalar_lea.vmem %s0, %s111
      $region20: #{adaptive_group_norm.1} parent=15 // pred_fallthru
        _
      // Predicated region
      $region21: #{adaptive_group_norm.1} parent=15 // pred_check
        %p113 = pneg %p54
      $region22: #{adaptive_group_norm.1} parent=15 // pred_check_branch
        %115 = sbr.rel (%p113) target = $region24
      $region23: #{adaptive_group_norm.1} parent=15 // pred_region
        %p116 = scmp.lt.s32.totalorder %s8, 7
        %s117 = scalar_select %p116, %s8, 7
        %s118 = smul.addr %s117, 8
        %s119 = scalar_lea.vmem %s1, %s118
      $region24: #{adaptive_group_norm.1} parent=15 // pred_fallthru
        _
    $region16: #{adaptive_group_norm.1} parent=5 // pred_fallthru
      _
    %p120 = scmp.le.s32.totalorder 1, %s8
    %p121 = scmp.lt.s32.totalorder %s8, 9
    %p122 = pnand %p120, %p121
    %p123 = pneg %p122
    // Predicated region
    $region25: #{adaptive_group_norm.1} parent=5 // pred_check
      _
    $region26: #{adaptive_group_norm.1} parent=5 // pred_check_branch
      %125 = sbr.rel (%p122) target = $region28
    $region27: #{adaptive_group_norm.1} parent=5 // pred_region
      %s126 = ssub.s32 %s8, 1
      %p127 = scmp.lt.s32.totalorder %s13, 7
      %s128 = scalar_select %p127, %s13, 7
      %s129 = smul.addr %s128, 4
      %s130 = smul.addr %s129, 8
      %s131 = scalar_lea.vmem %s0, %s130
      %p132 = pneg %p34
      %p133 = pneg %p31
      %p134 = scmp.lt.s32.totalorder %s13, 7
      %s135 = scalar_select %p134, %s13, 7
      %s136 = smul.addr %s135, 8
      %s137 = scalar_lea.vmem %s1, %s136
      %p138 = pneg %p60
      %p139 = pneg %p57
      %p140 = pneg %p86
      %p141 = pneg %p83
      %p142 = scmp.lt.s32.totalorder %s13, 7
      %s143 = scalar_select %p142, %s13, 7
      %s144 = smul.addr %s143, 4
      %s145 = smul.addr %s144, 8
      %s146 = scalar_lea.vmem %s2, %s145
      %p147 = scmp.lt.s32.totalorder %s13, 7
      %s148 = scalar_select %p147, %s13, 7
      %s149 = smul.addr %s148, 4
      %s150 = smul.addr %s149, 8
      %s151 = scalar_lea.vmem %s0, %s150
      %p152 = scmp.lt.s32.totalorder %s13, 7
      %s153 = scalar_select %p152, %s13, 7
      %s154 = smul.addr %s153, 8
      %s155 = scalar_lea.vmem %s1, %s154
      %p156 = scmp.lt.s32.totalorder %s13, 7
      %s157 = scalar_select %p156, %s13, 7
      %s158 = smul.addr %s157, 4
      %s159 = smul.addr %s158, 8
      %s160 = scalar_lea.vmem %s2, %s159
      %v161 = vld [vmem:[%s151] sm:$0xff]
      %v162 = vld [vmem:[%s151 + $0x8] sm:$0xff]
      %v163 = vld [vmem:[%s151 + $0x10] sm:$0xff]
      %v164 = vld [vmem:[%s151 + $0x18] sm:$0xff]
      %166 = vset.pattern.permute.xlu0 0
      %167 = vperm.xlu0 %166, %v161
      %v168 = vpop.permute.xlu0 %167
      %v170 = vsub.f32 %v161, %v168
      %v171 = vsub.f32 %v162, %v168
      %v172 = vsub.f32 %v163, %v168
      %v173 = vsub.f32 %v164, %v168
      %v174 = vadd.f32 %v170, %v171
      %v175 = vadd.f32 %v174, %v172
      %v176 = vadd.f32 %v175, %v173
      %177 = vadd.xlane.f32.xlu0 %v176
      %v178 = vpop.xlane.xlu0 %177
      %v179 = vmul.f32 %v170, %v170
      %v180 = vmul.f32 %v171, %v171
      %v181 = vmul.f32 %v172, %v172
      %v182 = vmul.f32 %v173, %v173
      %v183 = vadd.f32 %v179, %v180
      %v184 = vadd.f32 %v183, %v181
      %v185 = vadd.f32 %v184, %v182
      %186 = vadd.xlane.f32.xlu0 %v185
      %v187 = vpop.xlane.xlu0 %186
      %v188 = vmul.f32 %v178, 0.001953125
      %v189 = vmul.f32 %v187, 0.001953125
      %v190 = vmul.f32 %v188, %v188
      %v191 = vsub.f32 %v189, %v190
      %v192 = vmax.f32 %v191, 0.0
      %v193 = vadd.f32 %v188, %v161
      %v194 = vadd.f32 %v192, 1e-05
      %v195 = vrsqrt.pop %v194
      %v196 = vld [vmem:[%s155] sm:$0xff]
      %v197 = vmul.f32 %v195, %v196
      %v198 = vmul.f32 %v193, %v197
      %200 = vrot.lane.b32.xlu0 %v198, 2
      %v201 = vpop.permute.xlu0 %200
      %v203 = vsub.f32 %v196, %v201
      %v204 = vld [vmem:[%s151] sm:$0xff]
      %v205 = vld [vmem:[%s151 + $0x8] sm:$0xff]
      %207 = vset.pattern.permute.xlu0 0
      %208 = vperm.xlu0 %207, %v197
      %v209 = vpop.permute.xlu0 %208
      %v211 = vmul.f32 %v204, %v209
      %v212 = vmul.f32 %v205, %v209
      %214 = vset.pattern.permute.xlu0 2
      %215 = vperm.xlu0 %214, %v203
      %v216 = vpop.permute.xlu0 %215
      %v218 = vadd.f32 %v211, %v216
      %v219 = vadd.f32 %v212, %v216
      %220 = vst [vmem:[%s160] sm:$0xff] %v218
      %221 = vst [vmem:[%s160 + $0x8] sm:$0xff] %v219
      %222 = vrot.lane.b32.xlu0 %v197, 127
      %v223 = vpop.permute.xlu0 %222
      %v225 = vmul.f32 %v193, %v223
      %227 = vrot.lane.b32.xlu0 %v225, 3
      %v228 = vpop.permute.xlu0 %227
      %v230 = vsub.f32 %v196, %v228
      %v231 = vld [vmem:[%s151 + $0x10] sm:$0xff]
      %v232 = vld [vmem:[%s151 + $0x18] sm:$0xff]
      %233 = vset.pattern.permute.xlu0 1
      %234 = vperm.xlu0 %233, %v197
      %v235 = vpop.permute.xlu0 %234
      %v237 = vmul.f32 %v231, %v235
      %v238 = vmul.f32 %v232, %v235
      %240 = vset.pattern.permute.xlu0 3
      %241 = vperm.xlu0 %240, %v230
      %v242 = vpop.permute.xlu0 %241
      %v244 = vadd.f32 %v237, %v242
      %v245 = vadd.f32 %v238, %v242
      %246 = vst [vmem:[%s160 + $0x10] sm:$0xff] %v244
      %247 = vst [vmem:[%s160 + $0x18] sm:$0xff] %v245
      %p248 = scmp.lt.s32.totalorder %s13, 7
      %s249 = scalar_select %p248, %s13, 7
      %s250 = smul.addr %s249, 4
      %s251 = smul.addr %s250, 8
      %s252 = scalar_lea.vmem %s2, %s251
      // Predicated region
      $region29: #{adaptive_group_norm.1} parent=27 // pred_check
        %p253 = pneg %p83
      $region30: #{adaptive_group_norm.1} parent=27 // pred_check_branch
        %255 = sbr.rel (%p253) target = $region32
      $region31: #{adaptive_group_norm.1} parent=27 // pred_region
        _
      $region32: #{adaptive_group_norm.1} parent=27 // pred_fallthru
        _
    $region28: #{adaptive_group_norm.1} parent=5 // pred_fallthru
      _
    %p256 = scmp.le.s32.totalorder 2, %s8
    // Predicated region
    $region33: #{adaptive_group_norm.1} parent=5 // pred_check
      %p257 = pneg %p256
    $region34: #{adaptive_group_norm.1} parent=5 // pred_check_branch
      %259 = sbr.rel (%p257) target = $region36
    $region35: #{adaptive_group_norm.1} parent=5 // pred_region
      %s260 = ssub.s32 %s8, 2
      // Predicated region
      $region37: #{adaptive_group_norm.1} parent=35 // pred_check
        %p261 = pneg %p89
      $region38: #{adaptive_group_norm.1} parent=35 // pred_check_branch
        %263 = sbr.rel (%p261) target = $region40
      $region39: #{adaptive_group_norm.1} parent=35 // pred_region
        %p264 = scmp.lt.s32.totalorder %s14, 7
        %s265 = scalar_select %p264, %s14, 7
        %s266 = smul.addr %s265, 4
        %s267 = smul.addr %s266, 8
        %s268 = scalar_lea.vmem %s2, %s267
      $region40: #{adaptive_group_norm.1} parent=35 // pred_fallthru
        _
    $region36: #{adaptive_group_norm.1} parent=5 // pred_fallthru
      _
  $region6: #{adaptive_group_norm.1} parent=0 // loop_footer
    %s12 = sadd.s32 1, %s8
  $region7: #{adaptive_group_norm.1} parent=0 // loop_footer_branch
    %7 = sbr.rel target = $region3
  $region8: #{adaptive_group_norm.1} parent=0 // loop_exit
    _

</llo_original>
